<compile_context>
chip_gen: v5e
topology: v5e:2x2
jax: 0.10.0
libtpu: 0.0.40
codegen_flags: <defaults>
</compile_context>

<pallas_src>
import math
from functools import partial

import jax
import jax.numpy as jnp
import numpy as np
from jax.experimental import pallas as pl
from jax.experimental.pallas import tpu as pltpu


def _build_pe_table(model_dim: int, maximum_seq_len: int = 80) -> np.ndarray:
    """Reproduce the PE formula from the PyTorch __init__ (including its quirk
    of cos(pos / 10000 ** (2*(i+1)/d)) for odd columns — intentional, so the
    kernel matches the reference module exactly)."""
    assert model_dim % 2 == 0, "PositionalEncoder requires an even model_dim"
    pe = np.zeros((maximum_seq_len, model_dim), dtype=np.float32)
    for pos in range(maximum_seq_len):
        for i in range(0, model_dim, 2):
            pe[pos, i] = math.sin(pos / 10000 ** (2 * i / model_dim))
            pe[pos, i + 1] = math.cos(pos / 10000 ** (2 * (i + 1) / model_dim))
    return pe[None, :, :]  # (1, max_seq_len, model_dim)


def _round_up(x: int, m: int) -> int:
    return (x + m - 1) // m * m


def _per_step_budget_bytes() -> int:
    """Per-grid-step (double-buffered) working-set budget, scaled per chip."""
    try:
        vmem_cap = int(getattr(pltpu.get_tpu_info(), "vmem_capacity_bytes",
                               64 * 1024 * 1024))
    except Exception:
        vmem_cap = 64 * 1024 * 1024  # assume the smallest (v7x) if unknown
    # ~12.8 MiB on v7x (64 MiB physical VMEM); capped at 24 MiB on v5e/v6e.
    return max(8 * 1024 * 1024, min(24 * 1024 * 1024, vmem_cap // 5))


def _vmem_limit_bytes(working_set_bytes: int) -> int:
    """Explicit scoped-VMEM limit: computed working set + slack, clamped to a
    range safe on every generation (v5e scoped default is only 16 MiB; v7x has
    64 MiB physical)."""
    return int(max(16 * 1024 * 1024,
                   min(32 * 1024 * 1024, working_set_bytes + 2 * 1024 * 1024)))


def _pe_add_kernel(scale, x_ref, pe_ref, o_ref):
    # Pure VPU elementwise hot path.  Compute in f32 (portable: v5e's VPU has
    # no bf16 math) and cast back to the streaming dtype on the store.
    x = x_ref[...].astype(jnp.float32)
    p = pe_ref[...].astype(jnp.float32)
    o_ref[...] = (x * scale + p).astype(o_ref.dtype)


def positional_encoder(x: jax.Array, pe_full: jax.Array, model_dim: int,
                       *, donate_x: bool = False) -> jax.Array:
    """out = x * sqrt(model_dim) + pe_full[:, :S, :]   with x: (B, S, D)."""
    B, S, D = x.shape
    if pe_full.shape[-1] != D:
        raise ValueError("pe table model_dim mismatch")
    max_seq = pe_full.shape[1]
    if S > max_seq:
        raise ValueError(f"sequence length {S} exceeds PE table length {max_seq}")
    if x.dtype not in (jnp.float32, jnp.bfloat16):
        raise ValueError("kernel supports float32 / bfloat16 inputs")

    itemsize = jnp.dtype(x.dtype).itemsize
    sub = 8 if itemsize == 4 else 16               # physical sublane granule
    scale = float(math.sqrt(model_dim))
    budget = _per_step_budget_bytes()
    aliases = {0: 0} if donate_x else {}

    pe_sd = pe_full[:, :S, :].astype(x.dtype)      # stream pe in x's dtype

    # ---- Path A: row fold (B*S, D) — dense sublanes AND dense lanes. -------
    # Used when D is lane-aligned and S is sublane-aligned; fixes the small-B
    # sublane waste (v7x vst-slot bound) of the lane-fold path below.
    if D % 128 == 0 and S % sub == 0 and 6 * sub * D * itemsize <= budget:
        x2 = x.reshape(B * S, D)
        pe2 = pe_sd.reshape(S, D)

        # Largest multiple-of-`sub` divisor of S whose double-buffered working
        # set (x + pe + out blocks; rows/lanes fully aligned) fits the budget.
        tr_cap = max(sub, (budget // (6 * D * itemsize)) // sub * sub)
        if B == 1 and S >= 2 * sub:
            # Keep >= 2 parallel grid steps so both v7x TensorCores get work.
            tr_cap = min(tr_cap, max(sub, (S // 2) // sub * sub))
        TR = sub
        for cand in range(sub, min(S, tr_cap) + 1, sub):
            if S % cand == 0:
                TR = cand
        n_s = S // TR
        working = 6 * TR * D * itemsize

        out2 = pl.pallas_call(
            partial(_pe_add_kernel, scale),
            out_shape=jax.ShapeDtypeStruct((B * S, D), x.dtype),
            # Seq-blocks OUTER: the pe block is revisited (single DMA) across
            # the whole inner batch sweep, so pe traffic stays ~S*D.
            grid=(n_s, B),
            in_specs=[
                pl.BlockSpec((TR, D), lambda s, b: (b * n_s + s, 0)),  # x rows
                pl.BlockSpec((TR, D), lambda s, b: (s, 0)),            # pe rows
            ],
            out_specs=pl.BlockSpec((TR, D), lambda s, b: (b * n_s + s, 0)),
            compiler_params=pltpu.CompilerParams(
                dimension_semantics=("parallel", "parallel"),
                vmem_limit_bytes=_vmem_limit_bytes(working),
            ),
            input_output_aliases=aliases,
        )(x2, pe2)
        return out2.reshape(B, S, D)

    # ---- Path B: lane fold (B, F) with F = S*D padded to a 128 multiple. ---
    F = S * D
    F_pad = _round_up(F, 128)
    x2 = x.reshape(B, F)
    pe2 = pe_sd.reshape(1, F)
    if F_pad != F:
        x2 = jnp.pad(x2, ((0, 0), (0, F_pad - F)))
        pe2 = jnp.pad(pe2, ((0, 0), (0, F_pad - F)))

    # Batch (sublane) tile: full B when small, else one sublane granule with a
    # ragged (masked) last block handled by Pallas.
    TB = B if B <= sub else sub
    TB_phys = _round_up(TB, sub)                   # physical sublane padding
    # Per-step double-buffered bytes: x + out blocks (TB_phys rows each) plus
    # the pe block ((1, TF) physically occupies `sub` sublanes).
    per_lane_bytes = 2 * (2 * TB_phys + sub) * itemsize
    TF = min(F_pad, max(128, (budget // per_lane_bytes) // 128 * 128))
    n_f = pl.cdiv(F_pad, TF)
    if B == 1 and n_f == 1 and F_pad >= 2048:
        # Keep >= 2 parallel steps so both v7x TensorCores get work.
        TF = _round_up(F_pad // 2, 128)
        n_f = pl.cdiv(F_pad, TF)
    n_b = pl.cdiv(B, TB)
    working = per_lane_bytes * TF

    out2 = pl.pallas_call(
        partial(_pe_add_kernel, scale),
        out_shape=jax.ShapeDtypeStruct((B, F_pad), x.dtype),
        # F-blocks OUTER so the pe block stays resident across the inner batch
        # sweep (total pe traffic ~F, not B*F).
        grid=(n_f, n_b),
        in_specs=[
            pl.BlockSpec((TB, TF), lambda f, b: (b, f)),   # x
            pl.BlockSpec((1, TF), lambda f, b: (0, f)),    # pe (row-broadcast)
        ],
        out_specs=pl.BlockSpec((TB, TF), lambda f, b: (b, f)),
        compiler_params=pltpu.CompilerParams(
            dimension_semantics=("parallel", "parallel"),
            vmem_limit_bytes=_vmem_limit_bytes(working),
        ),
        input_output_aliases=aliases,
    )(x2, pe2)

    out = out2[:, :F] if F_pad != F else out2
    return out.reshape(B, S, D)


if __name__ == "__main__":
    max_seq_len = 80
    key = jax.random.PRNGKey(0)

    # Small shapes consistent with the module; each case exercises a code path.
    test_cases = [
        (2, 8, 32, jnp.float32),    # canonical demo shape; lane-fold path
        (2, 8, 128, jnp.float32),   # row-fold path (dense sublanes, D%128==0)
        (2, 8, 32, jnp.bfloat16),   # bf16 streaming path
        (2, 8, 24, jnp.float32),    # F = S*D not a multiple of 128 -> padding
    ]
    for batch, seq_len, model_dim, dtype in test_cases:
        key, sk = jax.random.split(key)
        x = jax.random.normal(sk, (batch, seq_len, model_dim),
                              dtype=jnp.float32).astype(dtype)
        pe = jnp.asarray(_build_pe_table(model_dim, max_seq_len))

        out = jax.block_until_ready(positional_encoder(x, pe, model_dim))

        # Reference (same semantics as the PyTorch forward, same dtype path).
        ref = (x.astype(jnp.float32) * math.sqrt(model_dim)
               + pe[:, :seq_len, :].astype(dtype).astype(jnp.float32)).astype(dtype)
        assert out.shape == x.shape and out.dtype == x.dtype
        tol = 1e-6 if dtype == jnp.float32 else 2e-2
        np.testing.assert_allclose(np.asarray(out, dtype=np.float32),
                                   np.asarray(ref, dtype=np.float32),
                                   rtol=tol, atol=tol)

    print("KERNEL_OK")
</pallas_src>

<mosaic_0001>
module attributes {stable_mosaic.version = 11 : i64} {
  func.func @_pe_add_kernel(%arg0: i32, %arg1: i32, %arg2: memref<2x256xf32, #tpu.memory_space<vmem>>, %arg3: memref<1x256xf32, #tpu.memory_space<vmem>>, %arg4: memref<2x256xf32, #tpu.memory_space<vmem>>) attributes {dimension_semantics = [#tpu.dimension_semantics<parallel>, #tpu.dimension_semantics<parallel>], iteration_bounds = array<i64: 1, 1>, scalar_prefetch = 0 : i64, scratch_operands = 0 : i64, tpu.core_type = #tpu.core_type<tc>, window_params = [{transform_indices = @transform_0, window_bounds = array<i64: 2, 256>}, {transform_indices = @transform_1, window_bounds = array<i64: 1, 256>}, {transform_indices = @transform_2, window_bounds = array<i64: 2, 256>}]} {
    %c0 = arith.constant 0 : index
    %c0_0 = arith.constant 0 : index
    %0 = vector.load %arg2[%c0, %c0_0] : memref<2x256xf32, #tpu.memory_space<vmem>>, vector<2x256xf32>
    %c0_1 = arith.constant 0 : index
    %c0_2 = arith.constant 0 : index
    %1 = vector.load %arg3[%c0_1, %c0_2] : memref<1x256xf32, #tpu.memory_space<vmem>>, vector<1x256xf32>
    %cst = arith.constant 5.65685415 : f32
    %2 = vector.broadcast %cst : f32 to vector<2x256xf32>
    %3 = arith.mulf %0, %2 : vector<2x256xf32>
    %4 = vector.broadcast %1 : vector<1x256xf32> to vector<2x256xf32>
    %5 = arith.addf %3, %4 : vector<2x256xf32>
    %c0_3 = arith.constant 0 : index
    %c0_4 = arith.constant 0 : index
    %6 = vector.load %arg4[%c0_3, %c0_4] : memref<2x256xf32, #tpu.memory_space<vmem>>, vector<2x256xf32>
    tpu.vector_store %arg4[%c0_3, %c0_4], %5 {strides = array<i32>} : memref<2x256xf32, #tpu.memory_space<vmem>>, vector<2x256xf32>,
    return
  }
  func.func @transform_0(%arg0: i32, %arg1: i32) -> (i32, i32) {
    %c0_i32 = arith.constant 0 : i32
    return %arg1, %arg0 : i32, i32
  }
  func.func @transform_1(%arg0: i32, %arg1: i32) -> (i32, i32) {
    %c0_i32 = arith.constant 0 : i32
    %c0_i32_0 = arith.constant 0 : i32
    return %c0_i32, %arg0 : i32, i32
  }
  func.func @transform_2(%arg0: i32, %arg1: i32) -> (i32, i32) {
    %c0_i32 = arith.constant 0 : i32
    return %arg1, %arg0 : i32, i32
  }
}

</mosaic_0001>

<llo_original>
// kernel: tpu_custom_call.1
$region0: #{tpu_custom_call.1}
  #allocation0 [shape = 'u32[]', space=smem, size = 0x4, offset = 0x4, fixed_abs, tag = 'smem constant byte address 0x4 - core index']
  #allocation1 [shape = 'u32[72,128]{1,0:T(1,128)}', space=vmem, size = 0x9000, scoped, tag = 'internal scratch']
  %s0 = inlined_call_operand.hbm [shape: f32[2,256], index: 0, kind: input, shape index: {}]
  %s1 = inlined_call_operand.hbm [shape: f32[1,256], index: 1, kind: input, shape index: {}]
  %s2 = inlined_call_operand.hbm [shape: f32[2,256], index: 2, kind: output, shape index: {}]
  %s3 = sld [smem:[#allocation0]]
  $region26: #{tpu_custom_call.1} parent=0
    _
  %s5 = ssub.s32 1, %s3
  %s6 = scalar_select 0, %s5, %s3
  $region1: #{tpu_custom_call.1} parent=0
    #allocation2 [shape = 'u8[2048]{0}', space=vmem, size = 0x800, scoped, tag = 'input window, operand 0, single buffered']
    #allocation3 [shape = 's32[1]{0}', space=sflag, size = 0x4, scoped, tag = 'scoped memory for tpu_custom_call.1']
    #allocation4 [shape = 's32[1]{0}', space=sflag, size = 0x4, scoped, tag = 'scoped memory for tpu_custom_call.1']
    #allocation5 [shape = 'u8[1024]{0}', space=vmem, size = 0x400, scoped, tag = 'input window, operand 1, single buffered']
    #allocation6 [shape = 's32[1]{0}', space=sflag, size = 0x4, scoped, tag = 'scoped memory for tpu_custom_call.1']
    #allocation7 [shape = 'u8[2048]{0}', space=vmem, size = 0x800, scoped, tag = 'output window, operand 0, single buffered']
    %7 = vsyncpa [#allocation3], 0
    %8 = vsyncpa [#allocation6], 0
    %9 = vsyncpa [#allocation4], 0
    // Predicated region
    $region2: #{tpu_custom_call.1} parent=1 // pred_check
      _
    $region3: #{tpu_custom_call.1} parent=1 // pred_check_branch
      %11 = sbr.rel (0) target = $region5
    $region4: #{tpu_custom_call.1} parent=1 // pred_region
      %13 = vsyncadd [#allocation3], 0
      %s15 = sshll.u32 %s0, 4
      %s16 = int_to_ptr.hbm [resolvable:$true] %s15
      %s17 = sshll.u32 [#allocation2], 4
      %s18 = int_to_ptr.vmem [resolvable:$true] %s17
      %20 = dma.hbm_to_vmem [thread:$0]  %s16, 64, %s18, [#allocation3]
    $region5: #{tpu_custom_call.1} parent=1 // pred_fallthru
      _
    // Predicated region
    $region6: #{tpu_custom_call.1} parent=1 // pred_check
      _
    $region7: #{tpu_custom_call.1} parent=1 // pred_check_branch
      %22 = sbr.rel (0) target = $region9
    $region8: #{tpu_custom_call.1} parent=1 // pred_region
      %24 = vsyncadd [#allocation6], 0
      %s26 = sshll.u32 %s1, 4
      %s27 = int_to_ptr.hbm [resolvable:$true] %s26
      %s28 = sshll.u32 [#allocation5], 4
      %s29 = int_to_ptr.vmem [resolvable:$true] %s28
      %31 = dma.hbm_to_vmem [thread:$0]  %s27, 32, %s29, [#allocation6]
    $region9: #{tpu_custom_call.1} parent=1 // pred_fallthru
      _
    // Predicated region
    $region10: #{tpu_custom_call.1} parent=1 // pred_check
      _
    $region11: #{tpu_custom_call.1} parent=1 // pred_check_branch
      %33 = sbr.rel (0) target = $region13
    $region12: #{tpu_custom_call.1} parent=1 // pred_region
      %35 = dma.done [#allocation3], 64
    $region13: #{tpu_custom_call.1} parent=1 // pred_fallthru
      _
    // Predicated region
    $region14: #{tpu_custom_call.1} parent=1 // pred_check
      _
    $region15: #{tpu_custom_call.1} parent=1 // pred_check_branch
      %37 = sbr.rel (0) target = $region17
    $region16: #{tpu_custom_call.1} parent=1 // pred_region
      %39 = dma.done [#allocation6], 32
    $region17: #{tpu_custom_call.1} parent=1 // pred_fallthru
      _
    %v40 = vld [vmem:[#allocation2] sm:$0xf]
    %v41 = vld [vmem:[#allocation5] sm:$0x3]
    %v42 = vmul.f32 %v40, 5.656854
    %v44 = vperm.slane %v41, 0
    %v45 = vperm.slane %v41, 1
    %v46 = vrot.slane %v45, 6
    %vm47 = vcmask 1041408
    %v48 = vsel %vm47, %v44, %v46
    %v50 = vadd.f32 %v42, %v48
    %51 = vst [vmem:[#allocation7] sm:$0xf] %v50
    // Predicated region
    $region18: #{tpu_custom_call.1} parent=1 // pred_check
      _
    $region19: #{tpu_custom_call.1} parent=1 // pred_check_branch
      %53 = sbr.rel (0) target = $region21
    $region20: #{tpu_custom_call.1} parent=1 // pred_region
      %55 = vsyncadd [#allocation4], 0
      %s57 = sshll.u32 [#allocation7], 4
      %s58 = int_to_ptr.vmem [resolvable:$true] %s57
      %s59 = sshll.u32 %s2, 4
      %s60 = int_to_ptr.hbm [resolvable:$true] %s59
      %62 = dma.vmem_to_hbm [thread:$0]  %s58, 64, %s60, [#allocation4]
    $region21: #{tpu_custom_call.1} parent=1 // pred_fallthru
      _
    // Predicated region
    $region22: #{tpu_custom_call.1} parent=1 // pred_check
      _
    $region23: #{tpu_custom_call.1} parent=1 // pred_check_branch
      %64 = sbr.rel (0) target = $region25
    $region24: #{tpu_custom_call.1} parent=1 // pred_region
      %66 = dma.done [#allocation4], 64
    $region25: #{tpu_custom_call.1} parent=1 // pred_fallthru
      _
    %67 = vsyncpa [#allocation3], 1
    %68 = vsyncpa [#allocation6], 1
    %69 = vsyncpa [#allocation4], 1

</llo_original>
